<compile_context>
chip_gen: v6e
topology: v6e:2x2x1
jax: 0.10.0
libtpu: 0.0.40
codegen_flags: <defaults>
</compile_context>

<pallas_src>
import jax
import jax.numpy as jnp
from jax import lax
from jax.experimental import pallas as pl
from jax.experimental.pallas import tpu as pltpu


def _round_up(a, b):
    return ((a + b - 1) // b) * b


def _patch_merge_kernel(x_ref, g_ref, b_ref, w_ref, o_ref):
    """LayerNorm over last dim (4C), then matmul with (4C, Np) weight.

    x_ref: (TM, 4C)   gathered/concatenated patches (input dtype)
    g_ref: (1, 4C)    LayerNorm gamma, f32
    b_ref: (1, 4C)    LayerNorm beta, f32
    w_ref: (4C, Np)   reduction weight (transposed vs. torch Linear, N padded
                      to a multiple of 128 lanes), in the input dtype
    o_ref: (TM, Np)
    """
    x = x_ref[...].astype(jnp.float32)            # LN statistics in f32
    mean = jnp.mean(x, axis=-1, keepdims=True)
    xc = x - mean
    var = jnp.mean(xc * xc, axis=-1, keepdims=True)
    xn = xc * lax.rsqrt(var + 1e-5)
    xn = xn * g_ref[...] + b_ref[...]             # affine in f32 (VPU, ~free)
    # Keep the MXU in the input/weight dtype (bf16 stays bf16); accumulate f32.
    out = jnp.dot(xn.astype(w_ref.dtype), w_ref[...],
                  preferred_element_type=jnp.float32)
    o_ref[...] = out.astype(o_ref.dtype)


def patch_merging(x, H, W, gamma, beta, weight, *, tile_rows=1024):
    """JAX/Pallas equivalent of PatchMerging.forward(x, H, W).

    Args:
      x:      (B, H*W, C)
      gamma:  (4C,)  LayerNorm weight
      beta:   (4C,)  LayerNorm bias
      weight: (2C, 4C)  torch nn.Linear(4C, 2C, bias=False).weight
    Returns:
      (B, ceil(H/2)*ceil(W/2), 2C)
    """
    B, L, C = x.shape
    assert L == H * W, "input feature has wrong size"

    # ---- 2x2 gather / concat (strided indexing; single fused XLA copy) ----
    x4 = x.reshape(B, H, W, C)
    if (H % 2 == 1) or (W % 2 == 1):              # matches F.pad(x,(0,0,0,W%2,0,H%2))
        x4 = jnp.pad(x4, ((0, 0), (0, H % 2), (0, W % 2), (0, 0)))
    Hp, Wp = x4.shape[1], x4.shape[2]

    x0 = x4[:, 0::2, 0::2, :]
    x1 = x4[:, 1::2, 0::2, :]
    x2 = x4[:, 0::2, 1::2, :]
    x3 = x4[:, 1::2, 1::2, :]
    xcat = jnp.concatenate([x0, x1, x2, x3], axis=-1)     # (B, Hp/2, Wp/2, 4C)

    K = 4 * C
    N = 2 * C
    R = B * (Hp // 2) * (Wp // 2)
    x2d = xcat.reshape(R, K)

    # ---- lane-dense output width (multiple of 128) ----
    Np = _round_up(N, 128)

    # ---- row tile size from a conservative VMEM budget ----
    itemsize = x.dtype.itemsize
    budget = 12 * 1024 * 1024                      # fits v5e 16MiB scoped default
    w_bytes = 2 * K * Np * itemsize                # weight (counted generously)
    per_row = (2 * K + 2 * Np) * itemsize          # double-buffered in + out tiles
    tm_cap = max(8, (budget - w_bytes) // per_row)
    TM = min(int(tile_rows), int(tm_cap), _round_up(R, 8))
    TM = max(8, (TM // 8) * 8)                     # sublane-aligned

    # ---- pad rows to a TM multiple (tail rows are sliced off below) ----
    Rp = _round_up(R, TM)
    if Rp != R:
        x2d = jnp.pad(x2d, ((0, Rp - R), (0, 0)))

    # ---- parameters: resident blocks, pre-cast / pre-padded in the wrapper ----
    w_t = weight.astype(x.dtype).T                 # (4C, 2C), matmul dtype = input dtype
    if Np != N:
        w_t = jnp.pad(w_t, ((0, 0), (0, Np - N)))  # zero-pad N to lane-dense width
    g2d = gamma.astype(jnp.float32).reshape(1, K)
    b2d = beta.astype(jnp.float32).reshape(1, K)

    grid = (Rp // TM,)
    out2d = pl.pallas_call(
        _patch_merge_kernel,
        out_shape=jax.ShapeDtypeStruct((Rp, Np), x.dtype),
        grid_spec=pltpu.PrefetchScalarGridSpec(
            num_scalar_prefetch=0,
            grid=grid,
            in_specs=[
                pl.BlockSpec((TM, K), lambda i: (i, 0)),    # streamed activation tiles
                pl.BlockSpec((1, K), lambda i: (0, 0)),     # gamma: resident
                pl.BlockSpec((1, K), lambda i: (0, 0)),     # beta:  resident
                pl.BlockSpec((K, Np), lambda i: (0, 0)),    # weight: resident
            ],
            out_specs=pl.BlockSpec((TM, Np), lambda i: (i, 0)),
        ),
        compiler_params=pltpu.CompilerParams(
            dimension_semantics=("parallel",)),             # megacore-shardable
    )(x2d, g2d, b2d, w_t)

    out2d = out2d[:R, :N]                                   # drop row/lane padding
    return out2d.reshape(B, (Hp // 2) * (Wp // 2), N)


def patch_merging_ref(x, H, W, gamma, beta, weight):
    """Pure-JAX reference matching the PyTorch module."""
    B, L, C = x.shape
    x = x.reshape(B, H, W, C)
    if (H % 2 == 1) or (W % 2 == 1):
        x = jnp.pad(x, ((0, 0), (0, H % 2), (0, W % 2), (0, 0)))
    x0 = x[:, 0::2, 0::2, :]
    x1 = x[:, 1::2, 0::2, :]
    x2 = x[:, 0::2, 1::2, :]
    x3 = x[:, 1::2, 1::2, :]
    x = jnp.concatenate([x0, x1, x2, x3], axis=-1)
    x = x.reshape(B, -1, 4 * C).astype(jnp.float32)
    mean = jnp.mean(x, axis=-1, keepdims=True)
    var = jnp.mean((x - mean) ** 2, axis=-1, keepdims=True)
    xn = (x - mean) * lax.rsqrt(var + 1e-5)
    xn = xn * gamma + beta
    return jnp.einsum("blk,ok->blo", xn, weight.astype(jnp.float32))


if __name__ == "__main__":
    key = jax.random.PRNGKey(0)
    k_x, k_g, k_b, k_w, k_x2 = jax.random.split(key, 5)

    # Case 1: even spatial dims (no pad path).
    B, H, W, dim = 2, 8, 8, 16                     # x: (2, 64, 16)
    x = jax.random.normal(k_x, (B, H * W, dim), dtype=jnp.float32)
    gamma = 1.0 + 0.1 * jax.random.normal(k_g, (4 * dim,), dtype=jnp.float32)
    beta = 0.1 * jax.random.normal(k_b, (4 * dim,), dtype=jnp.float32)
    weight = 0.05 * jax.random.normal(k_w, (2 * dim, 4 * dim), dtype=jnp.float32)

    out = jax.block_until_ready(patch_merging(x, H, W, gamma, beta, weight))
    ref = jax.block_until_ready(patch_merging_ref(x, H, W, gamma, beta, weight))
    assert out.shape == (B, (H // 2) * (W // 2), 2 * dim), out.shape
    assert jnp.allclose(out, ref.astype(out.dtype), atol=1e-4, rtol=1e-4), \
        float(jnp.max(jnp.abs(out - ref.astype(out.dtype))))

    # Case 2: odd spatial dims -> exercises the F.pad path and row-tail padding.
    H2, W2 = 7, 5
    x_odd = jax.random.normal(k_x2, (1, H2 * W2, dim), dtype=jnp.float32)
    out2 = jax.block_until_ready(patch_merging(x_odd, H2, W2, gamma, beta, weight))
    ref2 = jax.block_until_ready(patch_merging_ref(x_odd, H2, W2, gamma, beta, weight))
    assert out2.shape == (1, ((H2 + 1) // 2) * ((W2 + 1) // 2), 2 * dim), out2.shape
    assert jnp.allclose(out2, ref2.astype(out2.dtype), atol=1e-4, rtol=1e-4), \
        float(jnp.max(jnp.abs(out2 - ref2.astype(out2.dtype))))

    print("KERNEL_OK")
</pallas_src>

<mosaic_0001>
module attributes {stable_mosaic.version = 11 : i64} {
  func.func @_patch_merge_kernel(%arg0: i32, %arg1: memref<32x64xf32, #tpu.memory_space<vmem>>, %arg2: memref<1x64xf32, #tpu.memory_space<vmem>>, %arg3: memref<1x64xf32, #tpu.memory_space<vmem>>, %arg4: memref<64x128xf32, #tpu.memory_space<vmem>>, %arg5: memref<32x128xf32, #tpu.memory_space<vmem>>) attributes {dimension_semantics = [#tpu.dimension_semantics<parallel>], iteration_bounds = array<i64: 1>, scalar_prefetch = 0 : i64, scratch_operands = 0 : i64, tpu.core_type = #tpu.core_type<tc>, window_params = [{transform_indices = @transform_0, window_bounds = array<i64: 32, 64>}, {pipeline_mode = #tpu.pipeline_mode<synchronous>, transform_indices = @transform_1, window_bounds = array<i64: 1, 64>}, {pipeline_mode = #tpu.pipeline_mode<synchronous>, transform_indices = @transform_2, window_bounds = array<i64: 1, 64>}, {pipeline_mode = #tpu.pipeline_mode<synchronous>, transform_indices = @transform_3, window_bounds = array<i64: 64, 128>}, {transform_indices = @transform_4, window_bounds = array<i64: 32, 128>}]} {
    %c0 = arith.constant 0 : index
    %c0_0 = arith.constant 0 : index
    %0 = vector.load %arg1[%c0, %c0_0] : memref<32x64xf32, #tpu.memory_space<vmem>>, vector<32x64xf32>
    %cst = arith.constant dense<0.000000e+00> : vector<32xf32>
    %1 = vector.multi_reduction <add>, %0, %cst [1] : vector<32x64xf32> to vector<32xf32>
    %2 = vector.shape_cast %1 : vector<32xf32> to vector<32x1xf32>
    %cst_1 = arith.constant 6.400000e+01 : f32
    %3 = vector.broadcast %cst_1 : f32 to vector<32x1xf32>
    %4 = arith.divf %2, %3 : vector<32x1xf32>
    %5 = vector.broadcast %4 : vector<32x1xf32> to vector<32x64xf32>
    %6 = arith.subf %0, %5 : vector<32x64xf32>
    %7 = arith.mulf %6, %6 : vector<32x64xf32>
    %cst_2 = arith.constant dense<0.000000e+00> : vector<32xf32>
    %8 = vector.multi_reduction <add>, %7, %cst_2 [1] : vector<32x64xf32> to vector<32xf32>
    %9 = vector.shape_cast %8 : vector<32xf32> to vector<32x1xf32>
    %cst_3 = arith.constant 6.400000e+01 : f32
    %10 = vector.broadcast %cst_3 : f32 to vector<32x1xf32>
    %11 = arith.divf %9, %10 : vector<32x1xf32>
    %cst_4 = arith.constant 9.99999974E-6 : f32
    %12 = vector.broadcast %cst_4 : f32 to vector<32x1xf32>
    %13 = arith.addf %11, %12 : vector<32x1xf32>
    %14 = math.rsqrt %13 : vector<32x1xf32>
    %15 = vector.broadcast %14 : vector<32x1xf32> to vector<32x64xf32>
    %16 = arith.mulf %6, %15 : vector<32x64xf32>
    %c0_5 = arith.constant 0 : index
    %c0_6 = arith.constant 0 : index
    %17 = vector.load %arg2[%c0_5, %c0_6] : memref<1x64xf32, #tpu.memory_space<vmem>>, vector<1x64xf32>
    %18 = vector.broadcast %17 : vector<1x64xf32> to vector<32x64xf32>
    %19 = arith.mulf %16, %18 : vector<32x64xf32>
    %c0_7 = arith.constant 0 : index
    %c0_8 = arith.constant 0 : index
    %20 = vector.load %arg3[%c0_7, %c0_8] : memref<1x64xf32, #tpu.memory_space<vmem>>, vector<1x64xf32>
    %21 = vector.broadcast %20 : vector<1x64xf32> to vector<32x64xf32>
    %22 = arith.addf %19, %21 : vector<32x64xf32>
    %c0_9 = arith.constant 0 : index
    %c0_10 = arith.constant 0 : index
    %23 = vector.load %arg4[%c0_9, %c0_10] : memref<64x128xf32, #tpu.memory_space<vmem>>, vector<64x128xf32>
    %cst_11 = arith.constant dense<0.000000e+00> : vector<32x128xf32>
    %24 = tpu.matmul %22, %23, %cst_11 {dimension_numbers = #tpu.dot_dimension_numbers<[1], [0], [0], [1], [0, 0, 1, 1], [], []>} : vector<32x64xf32>, vector<64x128xf32>, vector<32x128xf32> -> vector<32x128xf32>
    %c0_12 = arith.constant 0 : index
    %c0_13 = arith.constant 0 : index
    %25 = vector.load %arg5[%c0_12, %c0_13] : memref<32x128xf32, #tpu.memory_space<vmem>>, vector<32x128xf32>
    tpu.vector_store %arg5[%c0_12, %c0_13], %24 {strides = array<i32>} : memref<32x128xf32, #tpu.memory_space<vmem>>, vector<32x128xf32>,
    return
  }
  func.func @transform_0(%arg0: i32) -> (i32, i32) {
    %c0_i32 = arith.constant 0 : i32
    %c0_i32_0 = arith.constant 0 : i32
    return %arg0, %c0_i32 : i32, i32
  }
  func.func @transform_1(%arg0: i32) -> (i32, i32) {
    %c0_i32 = arith.constant 0 : i32
    %c0_i32_0 = arith.constant 0 : i32
    %c0_i32_1 = arith.constant 0 : i32
    return %c0_i32, %c0_i32_0 : i32, i32
  }
  func.func @transform_2(%arg0: i32) -> (i32, i32) {
    %c0_i32 = arith.constant 0 : i32
    %c0_i32_0 = arith.constant 0 : i32
    %c0_i32_1 = arith.constant 0 : i32
    return %c0_i32, %c0_i32_0 : i32, i32
  }
  func.func @transform_3(%arg0: i32) -> (i32, i32) {
    %c0_i32 = arith.constant 0 : i32
    %c0_i32_0 = arith.constant 0 : i32
    %c0_i32_1 = arith.constant 0 : i32
    return %c0_i32, %c0_i32_0 : i32, i32
  }
  func.func @transform_4(%arg0: i32) -> (i32, i32) {
    %c0_i32 = arith.constant 0 : i32
    %c0_i32_0 = arith.constant 0 : i32
    return %arg0, %c0_i32 : i32, i32
  }
}

</mosaic_0001>

<llo_original>
// kernel: tpu_custom_call.1
$region0: #{tpu_custom_call.1}
  #allocation0 [shape = 'u32[]', space=smem, size = 0x4, offset = 0x4, fixed_abs, tag = 'smem constant byte address 0x4 - core index']
  #allocation1 [shape = 'u32[144,128]{1,0:T(1,128)}', space=vmem, size = 0x12000, scoped, tag = 'internal scratch']
  %s0 = inlined_call_operand.hbm [shape: f32[32,64], index: 0, kind: input, shape index: {}]
  %s1 = inlined_call_operand.vmem [shape: f32[1,64], index: 1, kind: input, shape index: {}]
  %s2 = inlined_call_operand.vmem [shape: f32[1,64], index: 2, kind: input, shape index: {}]
  %s3 = inlined_call_operand.hbm [shape: f32[64,128], index: 3, kind: input, shape index: {}]
  %s4 = inlined_call_operand.hbm [shape: f32[32,128], index: 4, kind: output, shape index: {}]
  %s5 = sld [smem:[#allocation0]]
  $region34: #{tpu_custom_call.1} parent=0
    _
  %s7 = ssub.s32 1, %s5
  %s8 = scalar_select 0, %s7, %s5
  $region1: #{tpu_custom_call.1} parent=0
    #allocation2 [shape = 'u8[16384]{0}', space=vmem, size = 0x4000, scoped, tag = 'input window, operand 0, single buffered']
    #allocation3 [shape = 's32[1]{0}', space=sflag, size = 0x4, scoped, tag = 'scoped memory for tpu_custom_call.1']
    #allocation4 [shape = 's32[1]{0}', space=sflag, size = 0x4, scoped, tag = 'scoped memory for tpu_custom_call.1']
    #allocation5 [shape = 'u8[32768]{0}', space=vmem, size = 0x8000, scoped, tag = 'input window, operand 3, single buffered']
    #allocation6 [shape = 's32[1]{0}', space=sflag, size = 0x4, scoped, tag = 'scoped memory for tpu_custom_call.1']
    #allocation7 [shape = 'u8[16384]{0}', space=vmem, size = 0x4000, scoped, tag = 'output window, operand 0, single buffered']
    %9 = vsyncpa [#allocation3], 0
    %10 = vsyncpa [#allocation6], 0
    %11 = vsyncpa [#allocation4], 0
    // Predicated region
    $region2: #{tpu_custom_call.1} parent=1 // pred_check
      _
    $region3: #{tpu_custom_call.1} parent=1 // pred_check_branch
      %13 = sbr.rel (0) target = $region5
    $region4: #{tpu_custom_call.1} parent=1 // pred_region
      %s15 = ssub.s32 512, 512
      %16 = vsyncadd [#allocation3], %s15
      %s17 = sshll.u32 [#allocation2], 4
      %s18 = int_to_ptr.vmem [resolvable:$true] %s17
      %23 = dma.hbm_to_vmem [thread:$0]  %s0, 512, %s18, [#allocation3], 128, 128, 8
    $region5: #{tpu_custom_call.1} parent=1 // pred_fallthru
      _
    // Predicated region
    $region6: #{tpu_custom_call.1} parent=1 // pred_check
      _
    $region7: #{tpu_custom_call.1} parent=1 // pred_check_branch
      %25 = sbr.rel (0) target = $region9
    $region8: #{tpu_custom_call.1} parent=1 // pred_region
      _
    $region9: #{tpu_custom_call.1} parent=1 // pred_fallthru
      _
    // Predicated region
    $region10: #{tpu_custom_call.1} parent=1 // pred_check
      _
    $region11: #{tpu_custom_call.1} parent=1 // pred_check_branch
      %27 = sbr.rel (0) target = $region13
    $region12: #{tpu_custom_call.1} parent=1 // pred_region
      _
    $region13: #{tpu_custom_call.1} parent=1 // pred_fallthru
      _
    // Predicated region
    $region14: #{tpu_custom_call.1} parent=1 // pred_check
      _
    $region15: #{tpu_custom_call.1} parent=1 // pred_check_branch
      %29 = sbr.rel (0) target = $region17
    $region16: #{tpu_custom_call.1} parent=1 // pred_region
      %s31 = ssub.s32 1024, 1024
      %32 = vsyncadd [#allocation6], %s31
      %s33 = sshll.u32 [#allocation5], 4
      %s34 = int_to_ptr.vmem [resolvable:$true] %s33
      %39 = dma.hbm_to_vmem [thread:$0]  %s3, 1024, %s34, [#allocation6], 128, 128, 8
    $region17: #{tpu_custom_call.1} parent=1 // pred_fallthru
      _
    // Predicated region
    $region18: #{tpu_custom_call.1} parent=1 // pred_check
      _
    $region19: #{tpu_custom_call.1} parent=1 // pred_check_branch
      %41 = sbr.rel (0) target = $region21
    $region20: #{tpu_custom_call.1} parent=1 // pred_region
      %42 = dma.done [#allocation3], 512
    $region21: #{tpu_custom_call.1} parent=1 // pred_fallthru
      _
    // Predicated region
    $region22: #{tpu_custom_call.1} parent=1 // pred_check
      _
    $region23: #{tpu_custom_call.1} parent=1 // pred_check_branch
      %44 = sbr.rel (0) target = $region25
    $region24: #{tpu_custom_call.1} parent=1 // pred_region
      %45 = dma.done [#allocation6], 1024
    $region25: #{tpu_custom_call.1} parent=1 // pred_fallthru
      _
    %v46 = vld [vmem:[#allocation2] sm:$0xff]
    %v47 = vld [vmem:[#allocation2 + $0x8] sm:$0xff]
    %v48 = vld [vmem:[#allocation2 + $0x10] sm:$0xff]
    %v49 = vld [vmem:[#allocation2 + $0x18] sm:$0xff]
    %vm50 = vcmask 523264
    %v51 = vsel %vm50, %v46, 0.0
    %52 = vadd.xlane.f32.xlu0 %v51
    %v53 = vpop.xlane.xlu0 %52
    %v54 = vsel %vm50, %v47, 0.0
    %55 = vadd.xlane.f32.xlu0 %v54
    %v56 = vpop.xlane.xlu0 %55
    %v57 = vsel %vm50, %v48, 0.0
    %58 = vadd.xlane.f32.xlu0 %v57
    %v59 = vpop.xlane.xlu0 %58
    %v60 = vsel %vm50, %v49, 0.0
    %61 = vadd.xlane.f32.xlu0 %v60
    %v62 = vpop.xlane.xlu0 %61
    %v63 = vrcp.pop 64.0
    %v64 = vmul.f32 %v53, %v63
    %v65 = vmul.f32 %v56, %v63
    %v66 = vmul.f32 %v59, %v63
    %v67 = vmul.f32 %v62, %v63
    %v68 = vsub.f32 %v46, %v64
    %v69 = vsub.f32 %v47, %v65
    %v70 = vsub.f32 %v48, %v66
    %v71 = vsub.f32 %v49, %v67
    %v72 = vmul.f32 %v68, %v68
    %v73 = vmul.f32 %v69, %v69
    %v74 = vmul.f32 %v70, %v70
    %v75 = vmul.f32 %v71, %v71
    %v76 = vsel %vm50, %v72, 0.0
    %77 = vadd.xlane.f32.xlu0 %v76
    %v78 = vpop.xlane.xlu0 %77
    %v79 = vsel %vm50, %v73, 0.0
    %80 = vadd.xlane.f32.xlu0 %v79
    %v81 = vpop.xlane.xlu0 %80
    %v82 = vsel %vm50, %v74, 0.0
    %83 = vadd.xlane.f32.xlu0 %v82
    %v84 = vpop.xlane.xlu0 %83
    %v85 = vsel %vm50, %v75, 0.0
    %86 = vadd.xlane.f32.xlu0 %v85
    %v87 = vpop.xlane.xlu0 %86
    %v88 = vmul.f32 %v78, %v63
    %v89 = vmul.f32 %v81, %v63
    %v90 = vmul.f32 %v84, %v63
    %v91 = vmul.f32 %v87, %v63
    %v92 = vadd.f32 %v88, 1e-05
    %v93 = vadd.f32 %v89, 1e-05
    %v94 = vadd.f32 %v90, 1e-05
    %v95 = vadd.f32 %v91, 1e-05
    %v96 = vrsqrt.pop %v92
    %v97 = vrsqrt.pop %v93
    %v98 = vrsqrt.pop %v94
    %v99 = vrsqrt.pop %v95
    %v100 = vmul.f32 %v68, %v96
    %v101 = vmul.f32 %v69, %v97
    %v102 = vmul.f32 %v70, %v98
    %v103 = vmul.f32 %v71, %v99
    %v104 = vld [vmem:[%s1] sm:$0x1]
    %v106 = vlaneseq
    %v107 = vshrl.u32 %v106, 7
    %v108 = vsub.s32 0, %v107
    %v109 = vrot.slane %v104, %v108
    %v111 = vmul.f32 %v100, %v109
    %v112 = vmul.f32 %v101, %v109
    %v113 = vmul.f32 %v102, %v109
    %v114 = vmul.f32 %v103, %v109
    %v115 = vld [vmem:[%s2] sm:$0x1]
    %v117 = vlaneseq
    %v118 = vshrl.u32 %v117, 7
    %v119 = vsub.s32 0, %v118
    %v120 = vrot.slane %v115, %v119
    %v122 = vadd.f32 %v111, %v120
    %v123 = vadd.f32 %v112, %v120
    %v124 = vadd.f32 %v113, %v120
    %v125 = vadd.f32 %v114, %v120
    %v126 = vld [vmem:[#allocation5] sm:$0xff]
    %v127 = vld [vmem:[#allocation5 + $0x8] sm:$0xff]
    %v128 = vld [vmem:[#allocation5 + $0x10] sm:$0xff]
    %v129 = vld [vmem:[#allocation5 + $0x18] sm:$0xff]
    %v130 = vld [vmem:[#allocation5 + $0x20] sm:$0xff]
    %v131 = vld [vmem:[#allocation5 + $0x28] sm:$0xff]
    %v132 = vld [vmem:[#allocation5 + $0x30] sm:$0xff]
    %v133 = vld [vmem:[#allocation5 + $0x38] sm:$0xff]
    %v135 = vsel %vm50, %v122, 0
    %v138 = vsel %vm50, %v123, 0
    %v141 = vsel %vm50, %v124, 0
    %v144 = vsel %vm50, %v125, 0
    %146 = vmatprep.subr.mxu0 0.0
    %147 = vmatpush1.msra.mxu0 0.0
    %148 = vmatprep.subr.mxu0 0.0
    %149 = vmatpush1.msra.mxu0 0.0
    %150 = vmatprep.subr.mxu0 0.0
    %151 = vmatpush1.msra.mxu0 0.0
    %152 = vmatprep.subr.mxu0 0.0
    %153 = vmatpush1.msra.mxu0 0.0
    %154 = vmatprep.subr.mxu0 0.0
    %155 = vmatpush1.msra.mxu0 0.0
    %156 = vmatprep.subr.mxu0 0.0
    %157 = vmatpush1.msra.mxu0 0.0
    %158 = vmatprep.subr.mxu0 0.0
    %159 = vmatpush1.msra.mxu0 0.0
    %160 = vmatprep.subr.mxu0 0.0
    %161 = vmatpush1.msra.mxu0 0.0
    %162 = vmatprep.subr.mxu0 0.0
    %163 = vmatpush1.msra.mxu0 %v133
    %164 = vmatprep.subr.mxu0 0.0
    %165 = vmatpush1.msra.mxu0 %v132
    %166 = vmatprep.subr.mxu0 0.0
    %167 = vmatpush1.msra.mxu0 %v131
    %168 = vmatprep.subr.mxu0 0.0
    %169 = vmatpush1.msra.mxu0 %v130
    %170 = vmatprep.subr.mxu0 0.0
    %171 = vmatpush1.msra.mxu0 %v129
    %172 = vmatprep.subr.mxu0 0.0
    %173 = vmatpush1.msra.mxu0 %v128
    %174 = vmatprep.subr.mxu0 0.0
    %175 = vmatpush1.msra.mxu0 %v127
    %176 = vmatprep.subr.mxu0 0.0
    %177 = vmatpush1.msra.mxu0 %v126
    %178 = vmatprep.subr.mxu0 0.0
    %179 = vmatpush2.msra.mxu0 0.0
    %180 = vmatprep.subr.mxu0 0.0
    %181 = vmatpush2.msra.mxu0 0.0
    %182 = vmatprep.subr.mxu0 0.0
    %183 = vmatpush2.msra.mxu0 0.0
    %184 = vmatprep.subr.mxu0 0.0
    %185 = vmatpush2.msra.mxu0 0.0
    %186 = vmatprep.subr.mxu0 0.0
    %187 = vmatpush2.msra.mxu0 0.0
    %188 = vmatprep.subr.mxu0 0.0
    %189 = vmatpush2.msra.mxu0 0.0
    %190 = vmatprep.subr.mxu0 0.0
    %191 = vmatpush2.msra.mxu0 0.0
    %192 = vmatprep.subr.mxu0 0.0
    %193 = vmatpush2.msra.mxu0 0.0
    %194 = vmatprep.subr.mxu0 0.0
    %195 = vmatpush2.msra.mxu0 0.0
    %196 = vmatprep.subr.mxu0 0.0
    %197 = vmatpush2.msra.mxu0 0.0
    %198 = vmatprep.subr.mxu0 0.0
    %199 = vmatpush2.msra.mxu0 0.0
    %200 = vmatprep.subr.mxu0 0.0
    %201 = vmatpush2.msra.mxu0 0.0
    %202 = vmatprep.subr.mxu0 0.0
    %203 = vmatpush2.msra.mxu0 0.0
    %204 = vmatprep.subr.mxu0 0.0
    %205 = vmatpush2.msra.mxu0 0.0
    %206 = vmatprep.subr.mxu0 0.0
    %207 = vmatpush2.msra.mxu0 0.0
    %208 = vmatprep.subr.mxu0 0.0
    %209 = vmatpush2.msra.mxu0 0.0
    %210 = vmatprep.mubr.f32.mxu0 0.0
    %211 = vmatmul.mubr.f32.gmra.mxu0 %v135
    %v212 = vpop.f32.mrf.mxu0
    %v213 = vadd.f32 0.0, %v212
    %v214 = vpop.f32.mrf.mxu0
    %215 = vmatprep.mubr.f32.mxu0 0.0
    %216 = vmatmul.mubr.f32.gmra.mxu0 %v138
    %v217 = vpop.f32.mrf.mxu0
    %v218 = vadd.f32 0.0, %v217
    %v219 = vpop.f32.mrf.mxu0
    %220 = vmatprep.mubr.f32.mxu0 0.0
    %221 = vmatmul.mubr.f32.gmra.mxu0 %v141
    %v222 = vpop.f32.mrf.mxu0
    %v223 = vadd.f32 0.0, %v222
    %v224 = vpop.f32.mrf.mxu0
    %225 = vmatprep.mubr.f32.mxu0 0.0
    %226 = vmatmul.mubr.f32.gmra.mxu0 %v144
    %v227 = vpop.f32.mrf.mxu0
    %v228 = vadd.f32 0.0, %v227
    %v229 = vpop.f32.mrf.mxu0
    %230 = vdwg.mxu0
    %231 = vst [vmem:[#allocation7] sm:$0xff] %v213
    %232 = vst [vmem:[#allocation7 + $0x8] sm:$0xff] %v218
    %233 = vst [vmem:[#allocation7 + $0x10] sm:$0xff] %v223
    %234 = vst [vmem:[#allocation7 + $0x18] sm:$0xff] %v228
    // Predicated region
    $region26: #{tpu_custom_call.1} parent=1 // pred_check
      _
    $region27: #{tpu_custom_call.1} parent=1 // pred_check_branch
      %236 = sbr.rel (0) target = $region29
    $region28: #{tpu_custom_call.1} parent=1 // pred_region
      %s238 = ssub.s32 512, 512
      %239 = vsyncadd [#allocation4], %s238
      %s240 = sshll.u32 [#allocation7], 4
      %s241 = int_to_ptr.vmem [resolvable:$true] %s240
      %246 = dma.vmem_to_hbm [thread:$0]  %s241, 512, %s4, [#allocation4], 128, 128, 8
    $region29: #{tpu_custom_call.1} parent=1 // pred_fallthru
      _
    // Predicated region
    $region30: #{tpu_custom_call.1} parent=1 // pred_check
      _
    $region31: #{tpu_custom_call.1} parent=1 // pred_check_branch
      %248 = sbr.rel (0) target = $region33
    $region32: #{tpu_custom_call.1} parent=1 // pred_region
      %249 = dma.done [#allocation4], 512
    $region33: #{tpu_custom_call.1} parent=1 // pred_fallthru
      _
    %250 = vsyncpa [#allocation3], 1
    %251 = vsyncpa [#allocation6], 1
    %252 = vsyncpa [#allocation4], 1

</llo_original>
